<compile_context>
chip_gen: v5e
topology: v5e:2x2
jax: 0.10.0
libtpu: 0.0.40
codegen_flags: <defaults>
</compile_context>

<pallas_src>
import numpy as np
import jax
import jax.numpy as jnp
from jax import lax
from jax.experimental import pallas as pl
from jax.experimental.pallas import tpu as pltpu


# ----------------------------------------------------------------------------
# WalkerAlias sampler (host-side, numpy) — identical construction to reference
# ----------------------------------------------------------------------------
class WalkerAlias:
    def __init__(self, probs):
        prob = np.array(probs, np.float32)
        prob /= np.sum(prob)
        threshold = np.ndarray(len(probs), np.float32)
        values = np.ndarray(len(probs) * 2, np.int32)
        il, ir = 0, 0
        pairs = list(zip(prob, range(len(probs))))
        pairs.sort()
        for prob_i, i in pairs:
            p = prob_i * len(probs)
            while p > 1 and ir < il:
                values[ir * 2 + 1] = i
                p -= 1.0 - threshold[ir]
                ir += 1
            threshold[il] = p
            values[il * 2] = i
            il += 1
        for i in range(ir, len(probs)):
            values[i * 2 + 1] = 0
        assert (values < len(threshold)).all()
        self.threshold = threshold
        self.values = values

    def sample(self, shape, uniform):
        # uniform: np.ndarray of U[0,1) with `shape`
        pb = uniform * len(self.threshold)
        index = pb.astype(np.int32)
        left_right = (self.threshold[index] < pb - index).astype(np.int32)
        return self.values[index * 2 + left_right]


# ----------------------------------------------------------------------------
# Pallas kernel: fused gather + (pos + N neg) log-sigmoid scores, lane-dense
# ----------------------------------------------------------------------------
def _ns_loss_kernel(w_ref, ids_ref, ctx_ref, out_ref):
    # w_ref   : (V, E)      bf16/f32, VMEM-resident (constant block index)
    # ids_ref : (K, TM)     int32, K = num_neg + 1, row 0 = positive id
    # ctx_ref : (TM, E)     bf16/f32, natural (token-major) layout
    # out_ref : (1, TM)     f32, per-token sum of log-sigmoid terms
    w = w_ref[...]                                   # (V, E)
    c = ctx_ref[...]                                 # (TM, E)
    ids = ids_ref[...]                               # (K, TM)
    V = w.shape[0]
    K, TM = ids.shape

    # All-vocab scores for this tile on the MXU (f32 accumulation):
    #   scores[v, t] = W[v] . ctx[t]      -> (V, TM), tokens lane-dense.
    scores = lax.dot_general(
        w, c, dimension_numbers=(((1,), (1,)), ((), ())),
        preferred_element_type=jnp.float32)          # (V, TM)

    # One-hot select scores[ids[k, t], t] per id row (static unrolled loop ->
    # temporaries stay (V, TM); no (N, E, TM) slab is ever formed).
    v_iota = lax.broadcasted_iota(jnp.int32, (V, TM), 0)
    rows = []
    for k in range(K):                               # K = num_neg + 1 (static)
        onehot = v_iota == ids[k:k + 1, :]           # (V, TM)
        s_k = jnp.sum(jnp.where(onehot, scores, 0.0),
                      axis=0, keepdims=True)         # (1, TM)
        # positive score keeps its sign; negatives are negated before logsig
        rows.append(s_k if k == 0 else -s_k)
    s = jnp.concatenate(rows, axis=0)                # (K, TM) signed scores

    # Numerically stable log-sigmoid over the whole (K, TM) block at once,
    # then reduce over pos + negatives.
    ls = jnp.minimum(s, 0.0) - jnp.log1p(jnp.exp(-jnp.abs(s)))
    out_ref[...] = jnp.sum(ls, axis=0, keepdims=True)


def negative_sampling_loss(W, X, context, neg_samples, *,
                           tile_lanes=8192, storage_dtype=jnp.bfloat16):
    """loss = -(sum_tokens [logsig(pos_score) + sum_N logsig(-neg_score)])"""
    B, S = X.shape
    V, E = W.shape
    N = neg_samples.shape[-1]
    K = N + 1
    M = B * S

    # --- lane tiling: tokens live on the 128-lane axis -----------------------
    m_pad128 = pl.cdiv(M, 128) * 128
    tile = min(int(tile_lanes), m_pad128)
    # v7x megacore: make sure the single "parallel" grid axis has >= 2 tiles
    # whenever M allows it, so both TensorCores get work.
    if m_pad128 >= 256:
        tile = min(tile, max(128, ((m_pad128 // 2) // 128) * 128))
    tile = max(128, (tile // 128) * 128)
    M_pad = pl.cdiv(m_pad128, tile) * tile
    num_tiles = M_pad // tile
    pad = M_pad - M

    # --- build lane-dense id slab (pos row 0, negs rows 1..N) ----------------
    # Only the tiny int32 arrays are rearranged / padded (essentially free) —
    # no (M*(1+N), E) float gather, no float-slab pad, no float-slab transpose.
    ids = jnp.concatenate(
        [X.reshape(1, M).astype(jnp.int32),
         jnp.transpose(neg_samples.reshape(M, N)).astype(jnp.int32)],
        axis=0)                                                    # (K, M)
    ctx = context.reshape(M, E).astype(storage_dtype)              # (M, E)
    if pad:
        ids = jnp.pad(ids, ((0, 0), (0, pad)))                     # pad id 0
        ctx = jnp.pad(ctx, ((0, pad), (0, 0)))                     # zero ctx
    Wv = W.astype(storage_dtype)                                   # (V, E)

    out = pl.pallas_call(
        _ns_loss_kernel,
        out_shape=jax.ShapeDtypeStruct((1, M_pad), jnp.float32),
        grid_spec=pltpu.PrefetchScalarGridSpec(
            num_scalar_prefetch=0,
            grid=(num_tiles,),
            in_specs=[
                # W: constant block index -> DMA'd once, stays VMEM-resident.
                pl.BlockSpec((V, E), lambda i: (0, 0)),
                # ids: lane-dense (K, tile) int32 per step.
                pl.BlockSpec((K, tile), lambda i: (0, i)),
                # ctx: natural token-major layout; transposition is done for
                # free by the MXU contraction inside the kernel.
                pl.BlockSpec((tile, E), lambda i: (i, 0)),
            ],
            out_specs=pl.BlockSpec((1, tile), lambda i: (0, i)),
        ),
        compiler_params=pltpu.CompilerParams(
            dimension_semantics=("parallel",)),
    )(Wv, ids, ctx)

    # drop padded lanes, final reduction (+ negation) in the wrapper
    return -jnp.sum(out[0, :M])


# ----------------------------------------------------------------------------
# Pure-JAX reference for sanity checking (matches the PyTorch module)
# ----------------------------------------------------------------------------
def _reference_loss(W, X, context, neg_samples):
    emb = jnp.take(W, X, axis=0)                                    # (B,S,E)
    pos_loss = jax.nn.log_sigmoid(jnp.sum(emb * context, axis=2))   # (B,S)
    neg_emb = jnp.take(W, neg_samples, axis=0)                      # (B,S,N,E)
    neg_score = jnp.sum(-neg_emb * context[:, :, None, :], axis=3)  # (B,S,N)
    neg_loss = jnp.sum(jax.nn.log_sigmoid(neg_score), axis=2)       # (B,S)
    return -jnp.sum(pos_loss + neg_loss)


if __name__ == "__main__":
    # Module config (synthetic, deterministic)
    counter = [5, 10, 3, 8, 2, 7, 1, 4, 6, 9, 2, 3, 5, 1, 8, 2, 4, 6, 3, 7]
    vocab = len(counter)
    embed_size = 32
    num_neg = 5
    power = 0.75
    pad_idx = 0
    B, S = 2, 8

    key = jax.random.PRNGKey(0)
    k_w, k_x, k_ctx, k_neg = jax.random.split(key, 4)

    # Embedding init: uniform(-v, v) with v = 2 / (embed_size + 1)
    v = 2.0 / (embed_size + 1)
    W = jax.random.uniform(k_w, (vocab, embed_size), jnp.float32, -v, v)

    X = jax.random.randint(k_x, (B, S), 0, vocab, dtype=jnp.int32)
    context = jax.random.normal(k_ctx, (B, S, embed_size), jnp.float32)

    # Negative sampling via WalkerAlias with deterministic uniforms
    sampler = WalkerAlias(np.power(np.array(counter, np.float64), power))
    ps = np.asarray(jax.random.uniform(k_neg, (B, S, num_neg), jnp.float32))
    neg_samples = jnp.asarray(sampler.sample((B, S, num_neg), ps), dtype=jnp.int32)

    loss = negative_sampling_loss(W, X, context, neg_samples)
    loss = jax.block_until_ready(loss)

    # Strict check against a reference that sees the same bf16-rounded inputs
    # (kernel accumulates in f32), plus a loose check against pure-f32 math.
    ref_f32 = _reference_loss(W, X, context, neg_samples)
    ref_bf16 = _reference_loss(W.astype(jnp.bfloat16).astype(jnp.float32), X,
                               context.astype(jnp.bfloat16).astype(jnp.float32),
                               neg_samples)
    assert np.allclose(np.asarray(loss), np.asarray(ref_bf16),
                       rtol=1e-3, atol=1e-3), (loss, ref_bf16)
    assert np.allclose(np.asarray(loss), np.asarray(ref_f32),
                       rtol=2e-2, atol=2e-2), (loss, ref_f32)

    print("KERNEL_OK")
</pallas_src>

<mosaic_0001>
module attributes {stable_mosaic.version = 11 : i64} {
  func.func @_ns_loss_kernel(%arg0: i32, %arg1: memref<20x32xbf16, #tpu.memory_space<vmem>>, %arg2: memref<6x128xi32, #tpu.memory_space<vmem>>, %arg3: memref<128x32xbf16, #tpu.memory_space<vmem>>, %arg4: memref<1x128xf32, #tpu.memory_space<vmem>>) attributes {dimension_semantics = [#tpu.dimension_semantics<parallel>], iteration_bounds = array<i64: 1>, scalar_prefetch = 0 : i64, scratch_operands = 0 : i64, tpu.core_type = #tpu.core_type<tc>, window_params = [{pipeline_mode = #tpu.pipeline_mode<synchronous>, transform_indices = @transform_0, window_bounds = array<i64: 20, 32>}, {transform_indices = @transform_1, window_bounds = array<i64: 6, 128>}, {transform_indices = @transform_2, window_bounds = array<i64: 128, 32>}, {transform_indices = @transform_3, window_bounds = array<i64: 1, 128>}]} {
    %c0 = arith.constant 0 : index
    %c0_0 = arith.constant 0 : index
    %0 = vector.load %arg1[%c0, %c0_0] : memref<20x32xbf16, #tpu.memory_space<vmem>>, vector<20x32xbf16>
    %c0_1 = arith.constant 0 : index
    %c0_2 = arith.constant 0 : index
    %1 = vector.load %arg3[%c0_1, %c0_2] : memref<128x32xbf16, #tpu.memory_space<vmem>>, vector<128x32xbf16>
    %c0_3 = arith.constant 0 : index
    %c0_4 = arith.constant 0 : index
    %2 = vector.load %arg2[%c0_3, %c0_4] : memref<6x128xi32, #tpu.memory_space<vmem>>, vector<6x128xi32>
    %cst = arith.constant dense<0.000000e+00> : vector<20x128xf32>
    %3 = tpu.matmul %0, %1, %cst {dimension_numbers = #tpu.dot_dimension_numbers<[1], [1], [0], [0], [0, 0, 1, 0], [], []>} : vector<20x32xbf16>, vector<128x32xbf16>, vector<20x128xf32> -> vector<20x128xf32>
    %4 = tpu.iota {dimensions = array<i32: 0>} : vector<20x128xi32>
    %5 = vector.extract_strided_slice %2 {offsets = [0, 0], sizes = [1, 128], strides = [1, 1]} : vector<6x128xi32> to vector<1x128xi32>
    %6 = vector.broadcast %5 : vector<1x128xi32> to vector<20x128xi32>
    %7 = arith.cmpi eq, %4, %6 : vector<20x128xi32>
    %cst_5 = arith.constant 0.000000e+00 : f32
    %8 = vector.broadcast %cst_5 : f32 to vector<20x128xf32>
    %9 = arith.select %7, %3, %8 : vector<20x128xi1>, vector<20x128xf32>
    %cst_6 = arith.constant dense<0.000000e+00> : vector<128xf32>
    %10 = vector.multi_reduction <add>, %9, %cst_6 [0] : vector<20x128xf32> to vector<128xf32>
    %11 = vector.shape_cast %10 : vector<128xf32> to vector<1x128xf32>
    %12 = vector.extract_strided_slice %2 {offsets = [1, 0], sizes = [1, 128], strides = [1, 1]} : vector<6x128xi32> to vector<1x128xi32>
    %13 = vector.broadcast %12 : vector<1x128xi32> to vector<20x128xi32>
    %14 = arith.cmpi eq, %4, %13 : vector<20x128xi32>
    %cst_7 = arith.constant 0.000000e+00 : f32
    %15 = vector.broadcast %cst_7 : f32 to vector<20x128xf32>
    %16 = arith.select %14, %3, %15 : vector<20x128xi1>, vector<20x128xf32>
    %cst_8 = arith.constant dense<0.000000e+00> : vector<128xf32>
    %17 = vector.multi_reduction <add>, %16, %cst_8 [0] : vector<20x128xf32> to vector<128xf32>
    %18 = vector.shape_cast %17 : vector<128xf32> to vector<1x128xf32>
    %cst_9 = arith.constant 0.000000e+00 : f32
    %19 = vector.broadcast %cst_9 : f32 to vector<1x128xf32>
    %20 = arith.subf %19, %18 : vector<1x128xf32>
    %21 = vector.extract_strided_slice %2 {offsets = [2, 0], sizes = [1, 128], strides = [1, 1]} : vector<6x128xi32> to vector<1x128xi32>
    %22 = vector.broadcast %21 : vector<1x128xi32> to vector<20x128xi32>
    %23 = arith.cmpi eq, %4, %22 : vector<20x128xi32>
    %cst_10 = arith.constant 0.000000e+00 : f32
    %24 = vector.broadcast %cst_10 : f32 to vector<20x128xf32>
    %25 = arith.select %23, %3, %24 : vector<20x128xi1>, vector<20x128xf32>
    %cst_11 = arith.constant dense<0.000000e+00> : vector<128xf32>
    %26 = vector.multi_reduction <add>, %25, %cst_11 [0] : vector<20x128xf32> to vector<128xf32>
    %27 = vector.shape_cast %26 : vector<128xf32> to vector<1x128xf32>
    %cst_12 = arith.constant 0.000000e+00 : f32
    %28 = vector.broadcast %cst_12 : f32 to vector<1x128xf32>
    %29 = arith.subf %28, %27 : vector<1x128xf32>
    %30 = vector.extract_strided_slice %2 {offsets = [3, 0], sizes = [1, 128], strides = [1, 1]} : vector<6x128xi32> to vector<1x128xi32>
    %31 = vector.broadcast %30 : vector<1x128xi32> to vector<20x128xi32>
    %32 = arith.cmpi eq, %4, %31 : vector<20x128xi32>
    %cst_13 = arith.constant 0.000000e+00 : f32
    %33 = vector.broadcast %cst_13 : f32 to vector<20x128xf32>
    %34 = arith.select %32, %3, %33 : vector<20x128xi1>, vector<20x128xf32>
    %cst_14 = arith.constant dense<0.000000e+00> : vector<128xf32>
    %35 = vector.multi_reduction <add>, %34, %cst_14 [0] : vector<20x128xf32> to vector<128xf32>
    %36 = vector.shape_cast %35 : vector<128xf32> to vector<1x128xf32>
    %cst_15 = arith.constant 0.000000e+00 : f32
    %37 = vector.broadcast %cst_15 : f32 to vector<1x128xf32>
    %38 = arith.subf %37, %36 : vector<1x128xf32>
    %39 = vector.extract_strided_slice %2 {offsets = [4, 0], sizes = [1, 128], strides = [1, 1]} : vector<6x128xi32> to vector<1x128xi32>
    %40 = vector.broadcast %39 : vector<1x128xi32> to vector<20x128xi32>
    %41 = arith.cmpi eq, %4, %40 : vector<20x128xi32>
    %cst_16 = arith.constant 0.000000e+00 : f32
    %42 = vector.broadcast %cst_16 : f32 to vector<20x128xf32>
    %43 = arith.select %41, %3, %42 : vector<20x128xi1>, vector<20x128xf32>
    %cst_17 = arith.constant dense<0.000000e+00> : vector<128xf32>
    %44 = vector.multi_reduction <add>, %43, %cst_17 [0] : vector<20x128xf32> to vector<128xf32>
    %45 = vector.shape_cast %44 : vector<128xf32> to vector<1x128xf32>
    %cst_18 = arith.constant 0.000000e+00 : f32
    %46 = vector.broadcast %cst_18 : f32 to vector<1x128xf32>
    %47 = arith.subf %46, %45 : vector<1x128xf32>
    %48 = vector.extract_strided_slice %2 {offsets = [5, 0], sizes = [1, 128], strides = [1, 1]} : vector<6x128xi32> to vector<1x128xi32>
    %49 = vector.broadcast %48 : vector<1x128xi32> to vector<20x128xi32>
    %50 = arith.cmpi eq, %4, %49 : vector<20x128xi32>
    %cst_19 = arith.constant 0.000000e+00 : f32
    %51 = vector.broadcast %cst_19 : f32 to vector<20x128xf32>
    %52 = arith.select %50, %3, %51 : vector<20x128xi1>, vector<20x128xf32>
    %cst_20 = arith.constant dense<0.000000e+00> : vector<128xf32>
    %53 = vector.multi_reduction <add>, %52, %cst_20 [0] : vector<20x128xf32> to vector<128xf32>
    %54 = vector.shape_cast %53 : vector<128xf32> to vector<1x128xf32>
    %cst_21 = arith.constant 0.000000e+00 : f32
    %55 = vector.broadcast %cst_21 : f32 to vector<1x128xf32>
    %56 = arith.subf %55, %54 : vector<1x128xf32>
    %57 = tpu.concatenate %11, %20, %29, %38, %47, %56 in 0 : vector<1x128xf32>, vector<1x128xf32>, vector<1x128xf32>, vector<1x128xf32>, vector<1x128xf32>, vector<1x128xf32> -> vector<6x128xf32>
    %cst_22 = arith.constant 0.000000e+00 : f32
    %58 = vector.broadcast %cst_22 : f32 to vector<6x128xf32>
    %59 = arith.minimumf %57, %58 : vector<6x128xf32>
    %60 = math.absf %57 : vector<6x128xf32>
    %cst_23 = arith.constant 0.000000e+00 : f32
    %61 = vector.broadcast %cst_23 : f32 to vector<6x128xf32>
    %62 = arith.subf %61, %60 : vector<6x128xf32>
    %63 = math.exp %62 : vector<6x128xf32>
    %64 = math.log1p %63 : vector<6x128xf32>
    %65 = arith.subf %59, %64 : vector<6x128xf32>
    %cst_24 = arith.constant dense<0.000000e+00> : vector<128xf32>
    %66 = vector.multi_reduction <add>, %65, %cst_24 [0] : vector<6x128xf32> to vector<128xf32>
    %67 = vector.shape_cast %66 : vector<128xf32> to vector<1x128xf32>
    %c0_25 = arith.constant 0 : index
    %c0_26 = arith.constant 0 : index
    %68 = vector.load %arg4[%c0_25, %c0_26] : memref<1x128xf32, #tpu.memory_space<vmem>>, vector<1x128xf32>
    tpu.vector_store %arg4[%c0_25, %c0_26], %67 {strides = array<i32>} : memref<1x128xf32, #tpu.memory_space<vmem>>, vector<1x128xf32>,
    return
  }
  func.func @transform_0(%arg0: i32) -> (i32, i32) {
    %c0_i32 = arith.constant 0 : i32
    %c0_i32_0 = arith.constant 0 : i32
    %c0_i32_1 = arith.constant 0 : i32
    return %c0_i32, %c0_i32_0 : i32, i32
  }
  func.func @transform_1(%arg0: i32) -> (i32, i32) {
    %c0_i32 = arith.constant 0 : i32
    %c0_i32_0 = arith.constant 0 : i32
    return %c0_i32, %arg0 : i32, i32
  }
  func.func @transform_2(%arg0: i32) -> (i32, i32) {
    %c0_i32 = arith.constant 0 : i32
    %c0_i32_0 = arith.constant 0 : i32
    return %arg0, %c0_i32 : i32, i32
  }
  func.func @transform_3(%arg0: i32) -> (i32, i32) {
    %c0_i32 = arith.constant 0 : i32
    %c0_i32_0 = arith.constant 0 : i32
    return %c0_i32, %arg0 : i32, i32
  }
}

</mosaic_0001>

<llo_original>
// kernel: tpu_custom_call.1
$region0: #{tpu_custom_call.1}
  #allocation0 [shape = 'u32[]', space=smem, size = 0x4, offset = 0x4, fixed_abs, tag = 'smem constant byte address 0x4 - core index']
  #allocation1 [shape = 'u32[72,128]{1,0:T(1,128)}', space=vmem, size = 0x9000, scoped, tag = 'internal scratch']
  %s0 = inlined_call_operand.vmem [shape: bf16[20,32], index: 0, kind: input, shape index: {}]
  %s1 = inlined_call_operand.vmem [shape: s32[6,128], index: 1, kind: input, shape index: {}]
  %s2 = inlined_call_operand.vmem [shape: bf16[128,32], index: 2, kind: input, shape index: {}]
  %s3 = inlined_call_operand.hbm [shape: f32[1,128], index: 3, kind: output, shape index: {}]
  %s4 = sld [smem:[#allocation0]]
  $region22: #{tpu_custom_call.1} parent=0
    _
  %s6 = ssub.s32 1, %s4
  %s7 = scalar_select 0, %s6, %s4
  $region1: #{tpu_custom_call.1} parent=0
    #allocation2 [shape = 'u8[512]{0}', space=vmem, size = 0x400, scoped, tag = 'output window, operand 0, single buffered']
    #allocation3 [shape = 's32[1]{0}', space=sflag, size = 0x4, scoped, tag = 'scoped memory for tpu_custom_call.1']
    %8 = vsyncpa [#allocation3], 0
    // Predicated region
    $region2: #{tpu_custom_call.1} parent=1 // pred_check
      _
    $region3: #{tpu_custom_call.1} parent=1 // pred_check_branch
      %10 = sbr.rel (0) target = $region5
    $region4: #{tpu_custom_call.1} parent=1 // pred_region
      _
    $region5: #{tpu_custom_call.1} parent=1 // pred_fallthru
      _
    // Predicated region
    $region6: #{tpu_custom_call.1} parent=1 // pred_check
      _
    $region7: #{tpu_custom_call.1} parent=1 // pred_check_branch
      %12 = sbr.rel (0) target = $region9
    $region8: #{tpu_custom_call.1} parent=1 // pred_region
      _
    $region9: #{tpu_custom_call.1} parent=1 // pred_fallthru
      _
    // Predicated region
    $region10: #{tpu_custom_call.1} parent=1 // pred_check
      _
    $region11: #{tpu_custom_call.1} parent=1 // pred_check_branch
      %14 = sbr.rel (0) target = $region13
    $region12: #{tpu_custom_call.1} parent=1 // pred_region
      _
    $region13: #{tpu_custom_call.1} parent=1 // pred_fallthru
      _
    %v15 = vld [vmem:[%s0] sm:$0xf]
    %v16 = vld [vmem:[%s0 + $0x4] sm:$0xf]
    %v17 = vld [vmem:[%s0 + $0x8] sm:$0x3]
    %v18 = vld [vmem:[%s2] sm:$0xf]
    %v19 = vld [vmem:[%s2 + $0x4] sm:$0xf]
    %v20 = vld [vmem:[%s2 + $0x8] sm:$0xf]
    %v21 = vld [vmem:[%s2 + $0xc] sm:$0xf]
    %v22 = vld [vmem:[%s2 + $0x10] sm:$0xf]
    %v23 = vld [vmem:[%s2 + $0x14] sm:$0xf]
    %v24 = vld [vmem:[%s2 + $0x18] sm:$0xf]
    %v25 = vld [vmem:[%s2 + $0x1c] sm:$0xf]
    %v26 = vld [vmem:[%s2 + $0x20] sm:$0xf]
    %v27 = vld [vmem:[%s2 + $0x24] sm:$0xf]
    %v28 = vld [vmem:[%s2 + $0x28] sm:$0xf]
    %v29 = vld [vmem:[%s2 + $0x2c] sm:$0xf]
    %v30 = vld [vmem:[%s2 + $0x30] sm:$0xf]
    %v31 = vld [vmem:[%s2 + $0x34] sm:$0xf]
    %v32 = vld [vmem:[%s2 + $0x38] sm:$0xf]
    %v33 = vld [vmem:[%s2 + $0x3c] sm:$0xf]
    %v34 = vld [vmem:[%s1] sm:$0x3f]
    %v38 = vunpack.c.l.b16 %v15
    %v39 = vunpack.c.l.b16 %v16
    %v40 = vunpack.c.l.b16 %v17
    %v41 = vpack.c.b16 %v39, %v38
    %v42 = vpack.c.b16 %v40, %v40
    %v59 = vunpack.c.l.b16 %v18
    %v60 = vunpack.c.l.b16 %v19
    %v61 = vunpack.c.l.b16 %v20
    %v62 = vunpack.c.l.b16 %v21
    %v63 = vunpack.c.l.b16 %v22
    %v64 = vunpack.c.l.b16 %v23
    %v65 = vunpack.c.l.b16 %v24
    %v66 = vunpack.c.l.b16 %v25
    %v67 = vunpack.c.l.b16 %v26
    %v68 = vunpack.c.l.b16 %v27
    %v69 = vunpack.c.l.b16 %v28
    %v70 = vunpack.c.l.b16 %v29
    %v71 = vunpack.c.l.b16 %v30
    %v72 = vunpack.c.l.b16 %v31
    %v73 = vunpack.c.l.b16 %v32
    %v74 = vunpack.c.l.b16 %v33
    %v75 = vpack.c.b16 %v60, %v59
    %v76 = vpack.c.b16 %v62, %v61
    %v77 = vpack.c.b16 %v64, %v63
    %v78 = vpack.c.b16 %v66, %v65
    %v79 = vpack.c.b16 %v68, %v67
    %v80 = vpack.c.b16 %v70, %v69
    %v81 = vpack.c.b16 %v72, %v71
    %v82 = vpack.c.b16 %v74, %v73
    %vm83 = vcmask 261120
    %v85 = vsel %vm83, %v41, 0
    %v88 = vsel %vm83, %v42, 0
    %v91 = vsel %vm83, %v75, 0
    %v94 = vsel %vm83, %v76, 0
    %v97 = vsel %vm83, %v77, 0
    %v100 = vsel %vm83, %v78, 0
    %v103 = vsel %vm83, %v79, 0
    %v106 = vsel %vm83, %v80, 0
    %v109 = vsel %vm83, %v81, 0
    %v112 = vsel %vm83, %v82, 0
    %114 = vmatpush.bf16.xpose.msra.mxu0 %v112
    %115 = vmatpush.bf16.xpose.msra.mxu0 %v109
    %116 = vmatpush.bf16.xpose.msra.mxu0 %v106
    %117 = vmatpush.bf16.xpose.msra.mxu0 %v103
    %118 = vmatpush.bf16.xpose.msra.mxu0 %v100
    %119 = vmatpush.bf16.xpose.msra.mxu0 %v97
    %120 = vmatpush.bf16.xpose.msra.mxu0 %v94
    %121 = vmatpush.bf16.xpose.msra.mxu0 %v91
    %122 = vmatmul.bf16.gmra.mxu0 %v85
    %v123 = vpop.f32.mrf.mxu0
    %v124 = vadd.f32 0.0, %v123
    %v125 = vpop.f32.mrf.mxu0
    %v126 = vadd.f32 0.0, %v125
    %127 = vmatmul.bf16.gmra.mxu0 %v88
    %v128 = vpop.f32.mrf.mxu0
    %v129 = vadd.f32 0.0, %v128
    %v130 = vpop.f32.mrf.mxu0
    %131 = vdwg.mxu0
    %v132 = vlaneseq
    %v133 = vshrl.u32 %v132, 7
    %v134 = vadd.s32 %v133, 8
    %v135 = vadd.s32 %v133, 16
    %v136 = vperm.slane %v34, 0
    %vm137 = vcmp.eq.s32.totalorder %v133, %v136
    %vm138 = vcmp.eq.s32.totalorder %v134, %v136
    %vm139 = vcmp.eq.s32.totalorder %v135, %v136
    %v140 = vsel %vm137, %v124, 0.0
    %v141 = vsel %vm138, %v126, 0.0
    %v142 = vsel %vm139, %v129, 0.0
    %v143 = vadd.f32 %v140, %v141
    %vm144 = vcmask 1043456
    %v145 = vsel %vm144, %v142, 0.0
    %v146 = vadd.f32 %v143, %v145
    %v147 = vrot.slane %v146, 4
    %v148 = vadd.f32 %v146, %v147
    %v149 = vrot.slane %v148, 2
    %v150 = vadd.f32 %v148, %v149
    %v151 = vrot.slane %v150, 1
    %v152 = vadd.f32 %v150, %v151
    %v153 = vperm.slane %v34, 1
    %vm154 = vcmp.eq.s32.totalorder %v133, %v153
    %vm155 = vcmp.eq.s32.totalorder %v134, %v153
    %vm156 = vcmp.eq.s32.totalorder %v135, %v153
    %v157 = vsel %vm154, %v124, 0.0
    %v158 = vsel %vm155, %v126, 0.0
    %v159 = vsel %vm156, %v129, 0.0
    %v160 = vadd.f32 %v157, %v158
    %v161 = vsel %vm144, %v159, 0.0
    %v162 = vadd.f32 %v160, %v161
    %v163 = vrot.slane %v162, 4
    %v164 = vadd.f32 %v162, %v163
    %v165 = vrot.slane %v164, 2
    %v166 = vadd.f32 %v164, %v165
    %v167 = vrot.slane %v166, 1
    %v168 = vadd.f32 %v166, %v167
    %v169 = vsub.f32 0.0, %v168
    %v170 = vperm.slane %v34, 2
    %vm171 = vcmp.eq.s32.totalorder %v133, %v170
    %vm172 = vcmp.eq.s32.totalorder %v134, %v170
    %vm173 = vcmp.eq.s32.totalorder %v135, %v170
    %v174 = vsel %vm171, %v124, 0.0
    %v175 = vsel %vm172, %v126, 0.0
    %v176 = vsel %vm173, %v129, 0.0
    %v177 = vadd.f32 %v174, %v175
    %v178 = vsel %vm144, %v176, 0.0
    %v179 = vadd.f32 %v177, %v178
    %v180 = vrot.slane %v179, 4
    %v181 = vadd.f32 %v179, %v180
    %v182 = vrot.slane %v181, 2
    %v183 = vadd.f32 %v181, %v182
    %v184 = vrot.slane %v183, 1
    %v185 = vadd.f32 %v183, %v184
    %v186 = vsub.f32 0.0, %v185
    %v187 = vperm.slane %v34, 3
    %vm188 = vcmp.eq.s32.totalorder %v133, %v187
    %vm189 = vcmp.eq.s32.totalorder %v134, %v187
    %vm190 = vcmp.eq.s32.totalorder %v135, %v187
    %v191 = vsel %vm188, %v124, 0.0
    %v192 = vsel %vm189, %v126, 0.0
    %v193 = vsel %vm190, %v129, 0.0
    %v194 = vadd.f32 %v191, %v192
    %v195 = vsel %vm144, %v193, 0.0
    %v196 = vadd.f32 %v194, %v195
    %v197 = vrot.slane %v196, 4
    %v198 = vadd.f32 %v196, %v197
    %v199 = vrot.slane %v198, 2
    %v200 = vadd.f32 %v198, %v199
    %v201 = vrot.slane %v200, 1
    %v202 = vadd.f32 %v200, %v201
    %v203 = vsub.f32 0.0, %v202
    %v204 = vperm.slane %v34, 4
    %vm205 = vcmp.eq.s32.totalorder %v133, %v204
    %vm206 = vcmp.eq.s32.totalorder %v134, %v204
    %vm207 = vcmp.eq.s32.totalorder %v135, %v204
    %v208 = vsel %vm205, %v124, 0.0
    %v209 = vsel %vm206, %v126, 0.0
    %v210 = vsel %vm207, %v129, 0.0
    %v211 = vadd.f32 %v208, %v209
    %v212 = vsel %vm144, %v210, 0.0
    %v213 = vadd.f32 %v211, %v212
    %v214 = vrot.slane %v213, 4
    %v215 = vadd.f32 %v213, %v214
    %v216 = vrot.slane %v215, 2
    %v217 = vadd.f32 %v215, %v216
    %v218 = vrot.slane %v217, 1
    %v219 = vadd.f32 %v217, %v218
    %v220 = vsub.f32 0.0, %v219
    %v221 = vperm.slane %v34, 5
    %vm222 = vcmp.eq.s32.totalorder %v133, %v221
    %vm223 = vcmp.eq.s32.totalorder %v134, %v221
    %vm224 = vcmp.eq.s32.totalorder %v135, %v221
    %v225 = vsel %vm222, %v124, 0.0
    %v226 = vsel %vm223, %v126, 0.0
    %v227 = vsel %vm224, %v129, 0.0
    %v228 = vadd.f32 %v225, %v226
    %v229 = vsel %vm144, %v227, 0.0
    %v230 = vadd.f32 %v228, %v229
    %v231 = vrot.slane %v230, 4
    %v232 = vadd.f32 %v230, %v231
    %v233 = vrot.slane %v232, 2
    %v234 = vadd.f32 %v232, %v233
    %v235 = vrot.slane %v234, 1
    %v236 = vadd.f32 %v234, %v235
    %v237 = vsub.f32 0.0, %v236
    %vm238 = vcmask 1040384
    %v239 = vsel %vm238, %v152, %v169
    %vm240 = vcmask 1041408
    %v241 = vsel %vm240, %v239, %v186
    %vm242 = vcmask 1042432
    %v243 = vsel %vm242, %v241, %v203
    %v244 = vsel %vm144, %v243, %v220
    %vm245 = vcmask 1044480
    %v246 = vsel %vm245, %v244, %v237
    %v247 = vmin.f32 %v246, 0.0
    %v248 = vand.u32 2147483647, %v246
    %v249 = vsub.f32 0.0, %v248
    %v250 = vmul.f32 %v249, 1.442695
    %v251 = vpow.pop %v250
    %v252 = vadd.f32 %v251, 1.0
    %v253 = vlog2.pop %v252
    %v254 = vmul.f32 %v253, 0.6931472
    %v255 = vmul.f32 -0.5, %v251
    %v256 = vadd.f32 %v255, 1.0
    %v257 = vmul.f32 %v256, %v251
    %v258 = vand.u32 2147483647, %v251
    %vm259 = vcmp.lt.f32.partialorder %v258, 0.0004427343
    %v260 = vsel %vm259, %v257, %v254
    %v261 = vsub.f32 %v247, %v260
    %vm262 = vcmask 1045504
    %v263 = vsel %vm262, %v261, 0.0
    %v264 = vrot.slane %v263, 4
    %v265 = vadd.f32 %v263, %v264
    %v266 = vrot.slane %v265, 2
    %v267 = vadd.f32 %v265, %v266
    %v268 = vrot.slane %v267, 1
    %v269 = vadd.f32 %v267, %v268
    %270 = vst [vmem:[#allocation2] sm:$0x1] %v269
    // Predicated region
    $region14: #{tpu_custom_call.1} parent=1 // pred_check
      _
    $region15: #{tpu_custom_call.1} parent=1 // pred_check_branch
      %272 = sbr.rel (0) target = $region17
    $region16: #{tpu_custom_call.1} parent=1 // pred_region
      %274 = vsyncadd [#allocation3], 0
      %s276 = sshll.u32 [#allocation2], 4
      %s277 = int_to_ptr.vmem [resolvable:$true] %s276
      %s278 = sshll.u32 %s3, 4
      %s279 = int_to_ptr.hbm [resolvable:$true] %s278
      %281 = dma.vmem_to_hbm [thread:$0]  %s277, 16, %s279, [#allocation3]
    $region17: #{tpu_custom_call.1} parent=1 // pred_fallthru
      _
    // Predicated region
    $region18: #{tpu_custom_call.1} parent=1 // pred_check
      _
    $region19: #{tpu_custom_call.1} parent=1 // pred_check_branch
      %283 = sbr.rel (0) target = $region21
    $region20: #{tpu_custom_call.1} parent=1 // pred_region
      %285 = dma.done [#allocation3], 16
    $region21: #{tpu_custom_call.1} parent=1 // pred_fallthru
      _
    %286 = vsyncpa [#allocation3], 1

</llo_original>
